<compile_context>
chip_gen: v7x
topology: tpu7x:2x2x1
jax: 0.10.0
libtpu: 0.0.40
codegen_flags: <defaults>
</compile_context>

<pallas_src>
import functools
import math

import jax
import jax.numpy as jnp
import numpy as np
from jax.experimental import pallas as pl
from jax.experimental.pallas import tpu as pltpu


# ----------------------------------------------------------------------------
# Kernel 1: embedding sum  (tok_embed + seg_embed + pos_embed broadcast)
# tiled over the T axis (activations are already in (T, B, E) layout).
# ----------------------------------------------------------------------------
def _embed_add_kernel(tok_ref, seg_ref, pos_ref, o_ref):
    # pos_ref block is (tile_t, 1, E); broadcasts over the B (sublane) axis.
    o_ref[...] = tok_ref[...] + seg_ref[...] + pos_ref[...]


def embed_add(tok_e, seg_e, pos_e, *, tile_t):
    T, B, E = tok_e.shape
    assert T % tile_t == 0
    return pl.pallas_call(
        _embed_add_kernel,
        out_shape=jax.ShapeDtypeStruct((T, B, E), jnp.float32),
        grid=(T // tile_t,),
        in_specs=[
            pl.BlockSpec((tile_t, B, E), lambda t: (t, 0, 0)),
            pl.BlockSpec((tile_t, B, E), lambda t: (t, 0, 0)),
            pl.BlockSpec((tile_t, 1, E), lambda t: (t, 0, 0)),
        ],
        out_specs=pl.BlockSpec((tile_t, B, E), lambda t: (t, 0, 0)),
        compiler_params=pltpu.CompilerParams(dimension_semantics=("parallel",)),
    )(tok_e, seg_e, pos_e)


# ----------------------------------------------------------------------------
# Kernel 2: one fused nn.TransformerEncoderLayer
#   (MHA -> residual -> LN1 -> FFN(relu) -> residual -> LN2), post-norm, relu.
# x is laid out (T, B, E); each t-slice is one independent B x B attention
# block (the batch_first=False semantics), so no mask is needed at all.
# ----------------------------------------------------------------------------
def _layer_norm(x, gamma, beta, eps=1e-5):
    mu = jnp.mean(x, axis=-1, keepdims=True)
    var = jnp.mean((x - mu) ** 2, axis=-1, keepdims=True)
    return (x - mu) * jax.lax.rsqrt(var + eps) * gamma + beta


def _encoder_layer_kernel(
    x_ref, wqkv_ref, bqkv_ref, wo_ref, bo_ref, ln1w_ref, ln1b_ref,
    w1_ref, b1_ref, w2_ref, b2_ref, ln2w_ref, ln2b_ref, o_ref,
    *, num_heads, head_dim, tile_t, fast,
):
    E = num_heads * head_dim
    scale = 1.0 / math.sqrt(head_dim)
    cdt = jnp.bfloat16 if fast else jnp.float32   # MXU operand dtype

    # weights stay VMEM-resident across the whole grid (constant index_map)
    wqkv = wqkv_ref[...]
    wo = wo_ref[...]
    w1 = w1_ref[...]
    w2 = w2_ref[...]
    bqkv = bqkv_ref[...]
    bo = bo_ref[...]
    b1 = b1_ref[...]
    b2 = b2_ref[...]
    ln1w, ln1b = ln1w_ref[...], ln1b_ref[...]
    ln2w, ln2b = ln2w_ref[...], ln2b_ref[...]

    for i in range(tile_t):                         # static unroll over the tile
        x = x_ref[i]                                # (B, E) f32 — one attention block
        qkv = jnp.dot(x.astype(cdt), wqkv,
                      preferred_element_type=jnp.float32) + bqkv        # (B, 3E) f32

        # Multi-head self-attention within this (B x B) block; accumulate each
        # head directly through its slice of the output projection (no concat).
        acc = jnp.zeros_like(x)                     # (B, E) f32
        for h in range(num_heads):
            lo = h * head_dim
            qh = (qkv[:, lo:lo + head_dim] * scale).astype(cdt)          # (B, hd)
            kh = qkv[:, E + lo:E + lo + head_dim].astype(cdt)            # (B, hd)
            vh = qkv[:, 2 * E + lo:2 * E + lo + head_dim].astype(cdt)    # (B, hd)

            s = jax.lax.dot_general(
                qh, kh, dimension_numbers=(((1,), (1,)), ((), ())),
                preferred_element_type=jnp.float32)                      # (B, B) f32
            s = s - jnp.max(s, axis=-1, keepdims=True)
            p = jnp.exp(s)
            denom = jnp.sum(p, axis=-1, keepdims=True)
            if fast:
                p = p * pl.reciprocal(denom, approx=True)   # EUP slot, ~free
            else:
                p = p / denom                               # exact for tight check

            ctx = jnp.dot(p.astype(cdt), vh,
                          preferred_element_type=jnp.float32)            # (B, hd)
            acc = acc + jnp.dot(ctx.astype(cdt), wo[lo:lo + head_dim, :],
                                preferred_element_type=jnp.float32)      # (B, E)

        x1 = _layer_norm(x + acc + bo, ln1w, ln1b)                       # post-norm

        # Feed-forward (relu), f32 accumulation, f32 residual + LN.
        h1 = jnp.dot(x1.astype(cdt), w1, preferred_element_type=jnp.float32) + b1
        h1 = jnp.maximum(h1, 0.0)
        h2 = jnp.dot(h1.astype(cdt), w2, preferred_element_type=jnp.float32) + b2

        o_ref[i] = _layer_norm(x1 + h2, ln2w, ln2b)


def encoder_layer(x_tbe, lp, num_heads, *, tile_t, compute_dtype=jnp.float32):
    T, B, E = x_tbe.shape
    assert T % tile_t == 0
    head_dim = E // num_heads
    fast = jnp.dtype(compute_dtype) == jnp.dtype(jnp.bfloat16)
    wdt = jnp.bfloat16 if fast else jnp.float32

    # Pre-transpose Linear weights so the kernel does x @ W; biases/LN params as
    # (1, N) rows; matmul weights are cast to the MXU operand dtype up front
    # (halves weight HBM/VMEM traffic in bf16 mode).
    args = [
        x_tbe,
        lp["wqkv"].T.astype(wdt), lp["bqkv"].reshape(1, -1),
        lp["wo"].T.astype(wdt), lp["bo"].reshape(1, -1),
        lp["ln1w"].reshape(1, -1), lp["ln1b"].reshape(1, -1),
        lp["w1"].T.astype(wdt), lp["b1"].reshape(1, -1),
        lp["w2"].T.astype(wdt), lp["b2"].reshape(1, -1),
        lp["ln2w"].reshape(1, -1), lp["ln2b"].reshape(1, -1),
    ]

    kernel = functools.partial(
        _encoder_layer_kernel,
        num_heads=num_heads, head_dim=head_dim, tile_t=tile_t, fast=fast)

    x_spec = pl.BlockSpec((tile_t, B, E), lambda t: (t, 0, 0))
    in_specs = [x_spec] + [pl.BlockSpec(a.shape, lambda t: (0, 0)) for a in args[1:]]

    # TODO(synk): for real BERT sizes on v7x (64 MiB VMEM) shrink tile_t / use
    # bf16 weights and optionally raise vmem_limit_bytes via CompilerParams.
    return pl.pallas_call(
        kernel,
        out_shape=jax.ShapeDtypeStruct((T, B, E), jnp.float32),
        grid=(T // tile_t,),
        in_specs=in_specs,
        out_specs=x_spec,
        compiler_params=pltpu.CompilerParams(dimension_semantics=("parallel",)),
    )(*args)


# ----------------------------------------------------------------------------
# Parameter init (deterministic) + full forward
# ----------------------------------------------------------------------------
def init_params(key, vocab_size, n_segments, max_len, embed_dim, n_layers):
    ff = embed_dim * 4
    keys = jax.random.split(key, 3 + n_layers)

    def nrm(k, shape):
        return (0.02 * jax.random.normal(k, shape)).astype(jnp.float32)

    params = {
        "tok": nrm(keys[0], (vocab_size, embed_dim)),
        "seg": nrm(keys[1], (n_segments, embed_dim)),
        "pos": nrm(keys[2], (max_len, embed_dim)),
        "layers": [],
    }
    for li in range(n_layers):
        lk = jax.random.split(keys[3 + li], 8)
        params["layers"].append({
            "wqkv": nrm(lk[0], (3 * embed_dim, embed_dim)),
            "bqkv": nrm(lk[1], (3 * embed_dim,)),
            "wo": nrm(lk[2], (embed_dim, embed_dim)),
            "bo": nrm(lk[3], (embed_dim,)),
            "ln1w": jnp.ones((embed_dim,), jnp.float32),
            "ln1b": jnp.zeros((embed_dim,), jnp.float32),
            "w1": nrm(lk[4], (ff, embed_dim)),
            "b1": nrm(lk[5], (ff,)),
            "w2": nrm(lk[6], (embed_dim, ff)),
            "b2": nrm(lk[7], (embed_dim,)),
            "ln2w": jnp.ones((embed_dim,), jnp.float32),
            "ln2b": jnp.zeros((embed_dim,), jnp.float32),
        })
    return params


def bert_forward(seq, seg, params, num_heads, *, tile_t=4, compute_dtype=jnp.float32):
    # Embedding gathers are data-dependent — kept as plain-JAX glue. Activations
    # are arranged as (T, B, E) so each attention block (tokens sharing the same
    # T-column under batch_first=False) is contiguous for the Pallas kernels.
    tok_e = jnp.take(params["tok"], seq.T, axis=0)        # (T, B, E)
    seg_e = jnp.take(params["seg"], seg.T, axis=0)        # (T, B, E)
    pos_e = params["pos"][:, None, :]                     # (T, 1, E)
    x = embed_add(tok_e, seg_e, pos_e, tile_t=tile_t)     # (T, B, E)
    for lp in params["layers"]:
        x = encoder_layer(x, lp, num_heads, tile_t=tile_t, compute_dtype=compute_dtype)
    return x.transpose(1, 0, 2)                           # back to (B, T, E)


# ----------------------------------------------------------------------------
# Pure-JAX reference (mirrors PyTorch math, batch_first=False convention)
# ----------------------------------------------------------------------------
def _ref_layer(x, lp, num_heads):
    A, Bn, E = x.shape
    hd = E // num_heads
    qkv = x @ lp["wqkv"].T + lp["bqkv"]
    q, k, v = jnp.split(qkv, 3, axis=-1)
    q = (q / math.sqrt(hd)).reshape(A, Bn, num_heads, hd)
    k = k.reshape(A, Bn, num_heads, hd)
    v = v.reshape(A, Bn, num_heads, hd)
    s = jnp.einsum("abhd,cbhd->bhac", q, k)
    p = jax.nn.softmax(s, axis=-1)
    o = jnp.einsum("bhac,cbhd->abhd", p, v).reshape(A, Bn, E)
    attn = o @ lp["wo"].T + lp["bo"]
    x = _layer_norm(x + attn, lp["ln1w"], lp["ln1b"])
    h = jax.nn.relu(x @ lp["w1"].T + lp["b1"])
    h = h @ lp["w2"].T + lp["b2"]
    return _layer_norm(x + h, lp["ln2w"], lp["ln2b"])


def bert_reference(seq, seg, params, num_heads):
    x = (jnp.take(params["tok"], seq, axis=0)
         + jnp.take(params["seg"], seg, axis=0)
         + params["pos"][None, :, :])
    for lp in params["layers"]:
        x = _ref_layer(x, lp, num_heads)
    return x


# ----------------------------------------------------------------------------
if __name__ == "__main__":
    vocab_size, n_segments, max_len = 50, 2, 16
    embed_dim, n_layers, attn_heads, dropout = 32, 2, 4, 0.1
    batch = 8

    key = jax.random.PRNGKey(0)
    k_seq, k_seg, k_par = jax.random.split(key, 3)
    seq = jax.random.randint(k_seq, (batch, max_len), 0, vocab_size, dtype=jnp.int32)
    seg = jax.random.randint(k_seg, (batch, max_len), 0, n_segments, dtype=jnp.int32)
    params = init_params(k_par, vocab_size, n_segments, max_len, embed_dim, n_layers)

    # f32 path — checked tightly against the pure-JAX / PyTorch-equivalent math.
    out = jax.block_until_ready(
        bert_forward(seq, seg, params, attn_heads, tile_t=4,
                     compute_dtype=jnp.float32))
    ref = jax.block_until_ready(bert_reference(seq, seg, params, attn_heads))
    assert out.shape == (batch, max_len, embed_dim)
    np.testing.assert_allclose(np.asarray(out), np.asarray(ref), rtol=1e-4, atol=1e-4)

    # bf16 MXU-operand fast path (f32 accumulation, f32 LN/softmax) — looser tol.
    out_fast = jax.block_until_ready(
        bert_forward(seq, seg, params, attn_heads, tile_t=4,
                     compute_dtype=jnp.bfloat16))
    np.testing.assert_allclose(np.asarray(out_fast), np.asarray(ref),
                               rtol=5e-2, atol=5e-2)

    print("KERNEL_OK")
</pallas_src>

<mosaic_0001>
module attributes {stable_mosaic.version = 11 : i64} {
  func.func @_embed_add_kernel(%arg0: i32, %arg1: memref<4x8x32xf32, #tpu.memory_space<vmem>>, %arg2: memref<4x8x32xf32, #tpu.memory_space<vmem>>, %arg3: memref<4x1x32xf32, #tpu.memory_space<vmem>>, %arg4: memref<4x8x32xf32, #tpu.memory_space<vmem>>) attributes {dimension_semantics = [#tpu.dimension_semantics<parallel>], iteration_bounds = array<i64: 4>, scalar_prefetch = 0 : i64, scratch_operands = 0 : i64, tpu.core_type = #tpu.core_type<tc>, window_params = [{transform_indices = @transform_0, window_bounds = array<i64: 4, 8, 32>}, {transform_indices = @transform_1, window_bounds = array<i64: 4, 8, 32>}, {transform_indices = @transform_2, window_bounds = array<i64: 4, 1, 32>}, {transform_indices = @transform_3, window_bounds = array<i64: 4, 8, 32>}]} {
    %c0 = arith.constant 0 : index
    %c0_0 = arith.constant 0 : index
    %c0_1 = arith.constant 0 : index
    %0 = vector.load %arg1[%c0, %c0_0, %c0_1] : memref<4x8x32xf32, #tpu.memory_space<vmem>>, vector<4x8x32xf32>
    %c0_2 = arith.constant 0 : index
    %c0_3 = arith.constant 0 : index
    %c0_4 = arith.constant 0 : index
    %1 = vector.load %arg2[%c0_2, %c0_3, %c0_4] : memref<4x8x32xf32, #tpu.memory_space<vmem>>, vector<4x8x32xf32>
    %2 = arith.addf %0, %1 : vector<4x8x32xf32>
    %c0_5 = arith.constant 0 : index
    %c0_6 = arith.constant 0 : index
    %c0_7 = arith.constant 0 : index
    %3 = vector.load %arg3[%c0_5, %c0_6, %c0_7] : memref<4x1x32xf32, #tpu.memory_space<vmem>>, vector<4x1x32xf32>
    %4 = vector.broadcast %3 : vector<4x1x32xf32> to vector<4x8x32xf32>
    %5 = arith.addf %2, %4 : vector<4x8x32xf32>
    %c0_8 = arith.constant 0 : index
    %c0_9 = arith.constant 0 : index
    %c0_10 = arith.constant 0 : index
    %6 = vector.load %arg4[%c0_8, %c0_9, %c0_10] : memref<4x8x32xf32, #tpu.memory_space<vmem>>, vector<4x8x32xf32>
    tpu.vector_store %arg4[%c0_8, %c0_9, %c0_10], %5 {strides = array<i32>} : memref<4x8x32xf32, #tpu.memory_space<vmem>>, vector<4x8x32xf32>,
    return
  }
  func.func @transform_0(%arg0: i32) -> (i32, i32, i32) {
    %c0_i32 = arith.constant 0 : i32
    %c0_i32_0 = arith.constant 0 : i32
    %c0_i32_1 = arith.constant 0 : i32
    return %arg0, %c0_i32, %c0_i32_0 : i32, i32, i32
  }
  func.func @transform_1(%arg0: i32) -> (i32, i32, i32) {
    %c0_i32 = arith.constant 0 : i32
    %c0_i32_0 = arith.constant 0 : i32
    %c0_i32_1 = arith.constant 0 : i32
    return %arg0, %c0_i32, %c0_i32_0 : i32, i32, i32
  }
  func.func @transform_2(%arg0: i32) -> (i32, i32, i32) {
    %c0_i32 = arith.constant 0 : i32
    %c0_i32_0 = arith.constant 0 : i32
    %c0_i32_1 = arith.constant 0 : i32
    return %arg0, %c0_i32, %c0_i32_0 : i32, i32, i32
  }
  func.func @transform_3(%arg0: i32) -> (i32, i32, i32) {
    %c0_i32 = arith.constant 0 : i32
    %c0_i32_0 = arith.constant 0 : i32
    %c0_i32_1 = arith.constant 0 : i32
    return %arg0, %c0_i32, %c0_i32_0 : i32, i32, i32
  }
}

</mosaic_0001>

<llo_original>
// kernel: tpu_custom_call.1
$region0: #{tpu_custom_call.1}
  #allocation0 [shape = 'u32[]', space=smem, size = 0x4, offset = 0x4, fixed_abs, tag = 'smem constant byte address 0x4 - core index']
  #allocation1 [shape = 'u32[144,128]{1,0:T(1,128)}', space=vmem, size = 0x12000, scoped, tag = 'internal scratch']
  %s0 = inlined_call_operand.hbm [shape: f32[16,8,32], index: 0, kind: input, shape index: {}]
  %s1 = inlined_call_operand.hbm [shape: f32[16,8,32], index: 1, kind: input, shape index: {}]
  %s2 = inlined_call_operand.hbm [shape: f32[16,1,32], index: 2, kind: input, shape index: {}]
  %s3 = inlined_call_operand.hbm [shape: f32[16,8,32], index: 3, kind: output, shape index: {}]
  %s4 = sld [smem:[#allocation0]]
  $region57: #{tpu_custom_call.1} parent=0
    _
  %s6 = ssub.s32 1, %s4
  %s7 = scalar_select 0, %s6, %s4
  $region1: #{tpu_custom_call.1} parent=0
    #allocation2 [shape = 'u8[32768]{0}', space=vmem, size = 0x8000, scoped, tag = 'input window, operand 0']
    #allocation3 [shape = 's32[2]{0}', space=sflag, size = 0x8, scoped, tag = 'scoped memory for tpu_custom_call.1']
    #allocation4 [shape = 's32[2]{0}', space=sflag, size = 0x8, scoped, tag = 'scoped memory for tpu_custom_call.1']
    #allocation5 [shape = 'u8[32768]{0}', space=vmem, size = 0x8000, scoped, tag = 'input window, operand 1']
    #allocation6 [shape = 's32[2]{0}', space=sflag, size = 0x8, scoped, tag = 'scoped memory for tpu_custom_call.1']
    #allocation7 [shape = 'u8[4096]{0}', space=vmem, size = 0x1000, scoped, tag = 'input window, operand 2']
    #allocation8 [shape = 'u8[32768]{0}', space=vmem, size = 0x8000, scoped, tag = 'output window, operand 0']
    %8 = vsyncpa [#allocation3], 0
    %s9 = scalar_lea.sflag [#allocation3], 1
    %10 = vsyncpa %s9, 0
    %11 = vsyncpa [#allocation6], 0
    %s12 = scalar_lea.sflag [#allocation6], 1
    %13 = vsyncpa %s12, 0
    %14 = vsyncpa [#allocation4], 0
    %s15 = scalar_lea.sflag [#allocation4], 1
    %16 = vsyncpa %s15, 0
    loop: start=0, step=1, limit=6
    $region2: #{tpu_custom_call.1} parent=1 // loop_pre_header
      _
    $region3: #{tpu_custom_call.1} parent=1 // loop_header
      %s18 = sphi 0, %s22
      %p19 = scmp.ge.s32.totalorder %s18, 6
      %s28 = sphi 0, %s30
      %s31 = sphi 0, %s28
      %s32 = sphi 0, %s31
      %s48 = sphi 0, %s32
      %s54 = sphi 0, %s56
      %s57 = sphi 0, %s54
      %s58 = sphi 0, %s57
      %s74 = sphi 0, %s58
      %s80 = sphi 0, %s82
      %s83 = sphi 0, %s80
      %s84 = sphi 0, %s83
      %s100 = sphi 0, %s84
      %s106 = sphi 0, %s108
      %s109 = sphi 0, %s106
      %s110 = sphi 0, %s109
      %s126 = sphi 0, %s110
    $region4: #{tpu_custom_call.1} parent=1 // loop_header_branch
      %21 = sbr.rel (%p19) target = $region8
    $region5: #{tpu_custom_call.1} parent=1 // loop_body
      %s23 = ssub.s32 %s18, 1
      %s24 = ssub.s32 %s18, 2
      %s25 = sadd.s32 %s18, 1
      %s26 = ssub.s32 %s18, %s25
      %p27 = scmp.eq.s32.totalorder %s26, 0
      %s29 = sadd.s32 %s28, 1
      %s30 = scalar_select %p27, %s28, %s29
      %p33 = pneg %p27
      %p34 = scmp.eq.s32.totalorder %s18, 3
      %p35 = por %p33, %p34
      %p36 = scmp.ne.s32.totalorder %s28, %s31
      %p37 = scmp.eq.s32.totalorder %s18, 0
      %p38 = por %p36, %p37
      %p39 = scmp.ne.s32.totalorder %s28, %s31
      %p40 = scmp.eq.s32.totalorder %s23, 3
      %p41 = por %p39, %p40
      %p42 = scmp.ne.s32.totalorder %s31, %s32
      %p43 = scmp.eq.s32.totalorder %s23, 0
      %p44 = por %p42, %p43
      %p45 = scmp.ne.s32.totalorder %s31, %s32
      %p46 = scmp.eq.s32.totalorder %s24, 3
      %p47 = por %p45, %p46
      %p49 = scmp.ne.s32.totalorder %s32, %s48
      %p50 = scmp.eq.s32.totalorder %s24, 0
      %p51 = por %p49, %p50
      %s52 = ssub.s32 %s18, %s25
      %p53 = scmp.eq.s32.totalorder %s52, 0
      %s55 = sadd.s32 %s54, 1
      %s56 = scalar_select %p53, %s54, %s55
      %p59 = pneg %p53
      %p60 = scmp.eq.s32.totalorder %s18, 3
      %p61 = por %p59, %p60
      %p62 = scmp.ne.s32.totalorder %s54, %s57
      %p63 = scmp.eq.s32.totalorder %s18, 0
      %p64 = por %p62, %p63
      %p65 = scmp.ne.s32.totalorder %s54, %s57
      %p66 = scmp.eq.s32.totalorder %s23, 3
      %p67 = por %p65, %p66
      %p68 = scmp.ne.s32.totalorder %s57, %s58
      %p69 = scmp.eq.s32.totalorder %s23, 0
      %p70 = por %p68, %p69
      %p71 = scmp.ne.s32.totalorder %s57, %s58
      %p72 = scmp.eq.s32.totalorder %s24, 3
      %p73 = por %p71, %p72
      %p75 = scmp.ne.s32.totalorder %s58, %s74
      %p76 = scmp.eq.s32.totalorder %s24, 0
      %p77 = por %p75, %p76
      %s78 = ssub.s32 %s18, %s25
      %p79 = scmp.eq.s32.totalorder %s78, 0
      %s81 = sadd.s32 %s80, 1
      %s82 = scalar_select %p79, %s80, %s81
      %p85 = pneg %p79
      %p86 = scmp.eq.s32.totalorder %s18, 3
      %p87 = por %p85, %p86
      %p88 = scmp.ne.s32.totalorder %s80, %s83
      %p89 = scmp.eq.s32.totalorder %s18, 0
      %p90 = por %p88, %p89
      %p91 = scmp.ne.s32.totalorder %s80, %s83
      %p92 = scmp.eq.s32.totalorder %s23, 3
      %p93 = por %p91, %p92
      %p94 = scmp.ne.s32.totalorder %s83, %s84
      %p95 = scmp.eq.s32.totalorder %s23, 0
      %p96 = por %p94, %p95
      %p97 = scmp.ne.s32.totalorder %s83, %s84
      %p98 = scmp.eq.s32.totalorder %s24, 3
      %p99 = por %p97, %p98
      %p101 = scmp.ne.s32.totalorder %s84, %s100
      %p102 = scmp.eq.s32.totalorder %s24, 0
      %p103 = por %p101, %p102
      %s104 = ssub.s32 %s18, %s25
      %p105 = scmp.eq.s32.totalorder %s104, 0
      %s107 = sadd.s32 %s106, 1
      %s108 = scalar_select %p105, %s106, %s107
      %p111 = pneg %p105
      %p112 = scmp.eq.s32.totalorder %s18, 3
      %p113 = por %p111, %p112
      %p114 = scmp.ne.s32.totalorder %s106, %s109
      %p115 = scmp.eq.s32.totalorder %s18, 0
      %p116 = por %p114, %p115
      %p117 = scmp.ne.s32.totalorder %s106, %s109
      %p118 = scmp.eq.s32.totalorder %s23, 3
      %p119 = por %p117, %p118
      %p120 = scmp.ne.s32.totalorder %s109, %s110
      %p121 = scmp.eq.s32.totalorder %s23, 0
      %p122 = por %p120, %p121
      %p123 = scmp.ne.s32.totalorder %s109, %s110
      %p124 = scmp.eq.s32.totalorder %s24, 3
      %p125 = por %p123, %p124
      %p127 = scmp.ne.s32.totalorder %s110, %s126
      %p128 = scmp.eq.s32.totalorder %s24, 0
      %p129 = por %p127, %p128
      %p130 = scmp.le.s32.totalorder 1, %s18
      %p131 = scmp.lt.s32.totalorder %s18, 5
      %p132 = pnand %p130, %p131
      %p133 = pneg %p132
      // Predicated region
      $region9: #{tpu_custom_call.1} parent=5 // pred_check
        _
      $region10: #{tpu_custom_call.1} parent=5 // pred_check_branch
        %135 = sbr.rel (%p132) target = $region12
      $region11: #{tpu_custom_call.1} parent=5 // pred_region
        %s136 = ssub.s32 %s18, 1
      $region12: #{tpu_custom_call.1} parent=5 // pred_fallthru
        _
      %p137 = scmp.lt.s32.totalorder %s18, 4
      // Predicated region
      $region13: #{tpu_custom_call.1} parent=5 // pred_check
        %p138 = pneg %p137
      $region14: #{tpu_custom_call.1} parent=5 // pred_check_branch
        %140 = sbr.rel (%p138) target = $region16
      $region15: #{tpu_custom_call.1} parent=5 // pred_region
        // Predicated region
        $region17: #{tpu_custom_call.1} parent=15 // pred_check
          %p141 = pneg %p38
        $region18: #{tpu_custom_call.1} parent=15 // pred_check_branch
          %143 = sbr.rel (%p141) target = $region20
        $region19: #{tpu_custom_call.1} parent=15 // pred_region
          %s144 = sand.u32 %s28, 1
          %s145 = scalar_lea.sflag [#allocation3], %s144
          %s146 = sand.u32 %s28, 1
          %s147 = smul.addr %s146, 32
          %s148 = scalar_lea.vmem [#allocation2], %s147
          %s149 = smul.u32 4, %s18
          %s151 = ssub.s32 512, 512
          %152 = vsyncadd %s145, %s151
          %s153 = smul.addr %s149, 128
          %s154 = scalar_lea.hbm %s0, %s153
          %s155 = sshll.u32 %s148, 4
          %s156 = int_to_ptr.vmem [resolvable:$true] %s155
          %161 = dma.hbm_to_vmem [thread:$0]  %s154, 512, %s156, %s145, 128, 128, 8
        $region20: #{tpu_custom_call.1} parent=15 // pred_fallthru
          _
        // Predicated region
        $region21: #{tpu_custom_call.1} parent=15 // pred_check
          %p162 = pneg %p64
        $region22: #{tpu_custom_call.1} parent=15 // pred_check_branch
          %164 = sbr.rel (%p162) target = $region24
        $region23: #{tpu_custom_call.1} parent=15 // pred_region
          %s165 = sand.u32 %s18, 1
          %s166 = scalar_lea.sflag [#allocation6], %s165
          %s167 = sand.u32 %s54, 1
          %s168 = smul.addr %s167, 32
          %s169 = scalar_lea.vmem [#allocation5], %s168
          %s170 = smul.u32 4, %s18
          %s172 = ssub.s32 512, 512
          %173 = vsyncadd %s166, %s172
          %s174 = smul.addr %s170, 128
          %s175 = scalar_lea.hbm %s1, %s174
          %s176 = sshll.u32 %s169, 4
          %s177 = int_to_ptr.vmem [resolvable:$true] %s176
          %182 = dma.hbm_to_vmem [thread:$0]  %s175, 512, %s177, %s166, 128, 128, 8
        $region24: #{tpu_custom_call.1} parent=15 // pred_fallthru
          _
        // Predicated region
        $region25: #{tpu_custom_call.1} parent=15 // pred_check
          %p183 = pneg %p90
        $region26: #{tpu_custom_call.1} parent=15 // pred_check_branch
          %185 = sbr.rel (%p183) target = $region28
        $region27: #{tpu_custom_call.1} parent=15 // pred_region
          %s186 = sand.u32 %s18, 1
          %s187 = scalar_lea.sflag [#allocation6], %s186
          %s188 = sand.u32 %s80, 1
          %s189 = smul.addr %s188, 4
          %s190 = scalar_lea.vmem [#allocation7], %s189
          %s191 = smul.u32 4, %s18
          %s193 = ssub.s32 64, 64
          %194 = vsyncadd %s187, %s193
          %s195 = smul.addr %s191, 16
          %s196 = scalar_lea.hbm %s2, %s195
          %s197 = sshll.u32 %s190, 4
          %s198 = int_to_ptr.vmem [resolvable:$true] %s197
          %203 = dma.hbm_to_vmem [thread:$0]  %s196, 64, %s198, %s187, 16, 16, 1
        $region28: #{tpu_custom_call.1} parent=15 // pred_fallthru
          _
      $region16: #{tpu_custom_call.1} parent=5 // pred_fallthru
        _
      %p204 = scmp.le.s32.totalorder 1, %s18
      %p205 = scmp.lt.s32.totalorder %s18, 5
      %p206 = pnand %p204, %p205
      %p207 = pneg %p206
      // Predicated region
      $region29: #{tpu_custom_call.1} parent=5 // pred_check
        _
      $region30: #{tpu_custom_call.1} parent=5 // pred_check_branch
        %209 = sbr.rel (%p206) target = $region32
      $region31: #{tpu_custom_call.1} parent=5 // pred_region
        %s210 = ssub.s32 %s18, 1
        %s211 = sand.u32 %s31, 1
        %s212 = scalar_lea.sflag [#allocation3], %s211
        %s213 = sand.u32 %s31, 1
        %s214 = smul.addr %s213, 32
        %s215 = scalar_lea.vmem [#allocation2], %s214
        // Predicated region
        $region33: #{tpu_custom_call.1} parent=31 // pred_check
          %p216 = pneg %p44
        $region34: #{tpu_custom_call.1} parent=31 // pred_check_branch
          %218 = sbr.rel (%p216) target = $region36
        $region35: #{tpu_custom_call.1} parent=31 // pred_region
          %219 = dma.done %s212, 512
        $region36: #{tpu_custom_call.1} parent=31 // pred_fallthru
          _
        %s220 = sand.u32 %s23, 1
        %s221 = scalar_lea.sflag [#allocation6], %s220
        %s222 = sand.u32 %s57, 1
        %s223 = smul.addr %s222, 32
        %s224 = scalar_lea.vmem [#allocation5], %s223
        // Predicated region
        $region37: #{tpu_custom_call.1} parent=31 // pred_check
          %p225 = pneg %p70
        $region38: #{tpu_custom_call.1} parent=31 // pred_check_branch
          %227 = sbr.rel (%p225) target = $region40
        $region39: #{tpu_custom_call.1} parent=31 // pred_region
          %228 = dma.done %s221, 512
        $region40: #{tpu_custom_call.1} parent=31 // pred_fallthru
          _
        %s229 = sand.u32 %s23, 1
        %s230 = scalar_lea.sflag [#allocation6], %s229
        %s231 = sand.u32 %s83, 1
        %s232 = smul.addr %s231, 4
        %s233 = scalar_lea.vmem [#allocation7], %s232
        // Predicated region
        $region41: #{tpu_custom_call.1} parent=31 // pred_check
          %p234 = pneg %p96
        $region42: #{tpu_custom_call.1} parent=31 // pred_check_branch
          %236 = sbr.rel (%p234) target = $region44
        $region43: #{tpu_custom_call.1} parent=31 // pred_region
          %237 = dma.done %s230, 64
        $region44: #{tpu_custom_call.1} parent=31 // pred_fallthru
          _
        %s238 = sand.u32 %s31, 1
        %s239 = scalar_lea.sflag [#allocation3], %s238
        %s240 = sand.u32 %s31, 1
        %s241 = smul.addr %s240, 32
        %s242 = scalar_lea.vmem [#allocation2], %s241
        %p243 = pneg %p44
        %p244 = pneg %p41
        %s245 = sand.u32 %s23, 1
        %s246 = scalar_lea.sflag [#allocation6], %s245
        %s247 = sand.u32 %s57, 1
        %s248 = smul.addr %s247, 32
        %s249 = scalar_lea.vmem [#allocation5], %s248
        %p250 = pneg %p70
        %p251 = pneg %p67
        %s252 = sand.u32 %s23, 1
        %s253 = scalar_lea.sflag [#allocation6], %s252
        %s254 = sand.u32 %s83, 1
        %s255 = smul.addr %s254, 4
        %s256 = scalar_lea.vmem [#allocation7], %s255
        %p257 = pneg %p96
        %p258 = pneg %p93
        %p259 = pneg %p122
        %p260 = pneg %p119
        %s261 = sand.u32 %s109, 1
        %s262 = scalar_lea.sflag [#allocation4], %s261
        %s263 = sand.u32 %s109, 1
        %s264 = smul.addr %s263, 32
        %s265 = scalar_lea.vmem [#allocation8], %s264
        %s266 = smul.u32 4, %s23
        %s267 = smul.u32 4, %s23
        %s268 = smul.u32 4, %s23
        %s269 = smul.u32 4, %s23
        %v270 = vld [vmem:[%s215] sm:$0xff]
        %v271 = vld [vmem:[%s215 + $0x8] sm:$0xff]
        %v272 = vld [vmem:[%s215 + $0x10] sm:$0xff]
        %v273 = vld [vmem:[%s215 + $0x18] sm:$0xff]
        %v274 = vld [vmem:[%s224] sm:$0xff]
        %v275 = vld [vmem:[%s224 + $0x8] sm:$0xff]
        %v276 = vld [vmem:[%s224 + $0x10] sm:$0xff]
        %v277 = vld [vmem:[%s224 + $0x18] sm:$0xff]
        %v278 = vadd.f32 %v270, %v274
        %v279 = vadd.f32 %v271, %v275
        %v280 = vadd.f32 %v272, %v276
        %v281 = vadd.f32 %v273, %v277
        %v282 = vld [vmem:[%s233] sm:$0x1]
        %v283 = vld [vmem:[%s233 + $0x1] sm:$0x1]
        %v284 = vld [vmem:[%s233 + $0x2] sm:$0x1]
        %v285 = vld [vmem:[%s233 + $0x3] sm:$0x1]
        %v290 = vlaneseq
        %v291 = vshrl.u32 %v290, 7
        %v292 = vsub.s32 0, %v291
        %v293 = vrot.slane %v282, %v292
        %v294 = vlaneseq
        %v295 = vshrl.u32 %v294, 7
        %v296 = vsub.s32 0, %v295
        %v297 = vrot.slane %v283, %v296
        %v298 = vlaneseq
        %v299 = vshrl.u32 %v298, 7
        %v300 = vsub.s32 0, %v299
        %v301 = vrot.slane %v284, %v300
        %v302 = vlaneseq
        %v303 = vshrl.u32 %v302, 7
        %v304 = vsub.s32 0, %v303
        %v305 = vrot.slane %v285, %v304
        %v310 = vadd.f32 %v278, %v293
        %v311 = vadd.f32 %v279, %v297
        %v312 = vadd.f32 %v280, %v301
        %v313 = vadd.f32 %v281, %v305
        %vm314 = vcmask 261120
        %315 = vst.msk [vmem:[%s265] sm:$0xff] %vm314, %v310
        %316 = vst.msk [vmem:[%s265 + $0x8] sm:$0xff] %vm314, %v311
        %317 = vst.msk [vmem:[%s265 + $0x10] sm:$0xff] %vm314, %v312
        %318 = vst.msk [vmem:[%s265 + $0x18] sm:$0xff] %vm314, %v313
        %s319 = sand.u32 %s109, 1
        %s320 = scalar_lea.sflag [#allocation4], %s319
        %s321 = sand.u32 %s109, 1
        %s322 = smul.addr %s321, 32
        %s323 = scalar_lea.vmem [#allocation8], %s322
        // Predicated region
        $region45: #{tpu_custom_call.1} parent=31 // pred_check
          %p324 = pneg %p119
        $region46: #{tpu_custom_call.1} parent=31 // pred_check_branch
          %326 = sbr.rel (%p324) target = $region48
        $region47: #{tpu_custom_call.1} parent=31 // pred_region
          %s327 = smul.u32 4, %s23
          %s329 = ssub.s32 512, 512
          %330 = vsyncadd %s320, %s329
          %s331 = smul.addr %s327, 128
          %s332 = scalar_lea.hbm %s3, %s331
          %s333 = sshll.u32 %s323, 4
          %s334 = int_to_ptr.vmem [resolvable:$true] %s333
          %339 = dma.vmem_to_hbm [thread:$0]  %s334, 512, %s332, %s320, 128, 128, 8
        $region48: #{tpu_custom_call.1} parent=31 // pred_fallthru
          _
      $region32: #{tpu_custom_call.1} parent=5 // pred_fallthru
        _
      %p340 = scmp.le.s32.totalorder 2, %s18
      // Predicated region
      $region49: #{tpu_custom_call.1} parent=5 // pred_check
        %p341 = pneg %p340
      $region50: #{tpu_custom_call.1} parent=5 // pred_check_branch
        %343 = sbr.rel (%p341) target = $region52
      $region51: #{tpu_custom_call.1} parent=5 // pred_region
        %s344 = ssub.s32 %s18, 2
        // Predicated region
        $region53: #{tpu_custom_call.1} parent=51 // pred_check
          %p345 = pneg %p125
        $region54: #{tpu_custom_call.1} parent=51 // pred_check_branch
          %347 = sbr.rel (%p345) target = $region56
        $region55: #{tpu_custom_call.1} parent=51 // pred_region
          %s348 = sand.u32 %s110, 1
          %s349 = scalar_lea.sflag [#allocation4], %s348
          %s350 = sand.u32 %s110, 1
          %s351 = smul.addr %s350, 32
          %s352 = scalar_lea.vmem [#allocation8], %s351
          %353 = dma.done %s349, 512
        $region56: #{tpu_custom_call.1} parent=51 // pred_fallthru
          _
      $region52: #{tpu_custom_call.1} parent=5 // pred_fallthru
        _
    $region6: #{tpu_custom_call.1} parent=1 // loop_footer
      %s22 = sadd.s32 1, %s18
    $region7: #{tpu_custom_call.1} parent=1 // loop_footer_branch
      %17 = sbr.rel target = $region3
    $region8: #{tpu_custom_call.1} parent=1 // loop_exit
      _
    %354 = vsyncpa [#allocation3], 1
    %s355 = scalar_lea.sflag [#allocation3], 1
    %356 = vsyncpa %s355, 1
    %357 = vsyncpa [#allocation6], 1
    %s358 = scalar_lea.sflag [#allocation6], 1
    %359 = vsyncpa %s358, 1
    %360 = vsyncpa [#allocation4], 1
    %s361 = scalar_lea.sflag [#allocation4], 1
    %362 = vsyncpa %s361, 1

</llo_original>
